<compile_context>
chip_gen: v6e
topology: v6e:2x2x1
jax: 0.10.0
libtpu: 0.0.40
codegen_flags: <defaults>
</compile_context>

<pallas_src>
import functools

import jax
import jax.numpy as jnp
import numpy as np
from jax import lax
from jax.experimental import pallas as pl
from jax.experimental.pallas import tpu as pltpu


def _fused_basic_block_kernel(p1_ref, w1_ref, w2_ref, s1_ref, b1_ref,
                              s2_ref, b2_ref, res_ref, out_ref, *, H, L):
    """Fused conv3x3->BN->ReLU->conv3x3->BN->(+x)->ReLU for one image.

    Row layout: an image plane is (rows, L) with L = W*C on the 128-lane axis.

      p1_ref : (1, H+2, 3*L) bf16  row-direction im2col of the zero-padded
                                   input (includes the 1-row halo of h)
      w1_ref : (3*L, L)      bf16  layer-1 banded weights (dx taps + W padding
                                   folded in), K = 3*L
      w2_ref : (3, L, L)     bf16  layer-2 banded weights, one per dy tap
      s*_ref : (1, L)        f32   folded BN scale, tiled over W
      b*_ref : (1, L)        f32   folded BN bias,  tiled over W
      res_ref: (1, H, L)     f32   identity shortcut (x in row layout)
      out_ref: (1, H, L)     f32
    """
    # ---- layer 1: a single im2col matmul on the MXU, f32 accumulation ------
    acc1 = jnp.dot(p1_ref[0], w1_ref[...],
                   preferred_element_type=jnp.float32)          # (H+2, L)
    h = jnp.maximum(acc1 * s1_ref[0] + b1_ref[0], 0.0)          # BN + ReLU

    # Rows 0 and H+1 of h are the zero halo the second conv needs; relu(bias)
    # is not necessarily 0, so force them to 0 with a row mask (VPU only).
    r = lax.broadcasted_iota(jnp.int32, (H + 2, 1), 0)
    h_ext = jnp.where(jnp.logical_and(r >= 1, r <= H), h, 0.0)  # (H+2, L) f32

    # ---- layer 2: three row-shifted banded matmuls; h never leaves VMEM ----
    acc2 = jnp.zeros((H, L), jnp.float32)
    for dy in range(3):                      # unrolled, static sublane slices
        acc2 = acc2 + jnp.dot(h_ext[dy:dy + H, :].astype(jnp.bfloat16),
                              w2_ref[dy],
                              preferred_element_type=jnp.float32)

    # ---- fused BN + residual + ReLU: one wide lane-dense (H, L) store ------
    y = acc2 * s2_ref[0] + b2_ref[0] + res_ref[0]
    out_ref[0] = jnp.maximum(y, 0.0).astype(out_ref.dtype)


def _band_weights(w_hwio, W):
    """(3, 3, Cin, Cout) HWIO -> (3, W*Cin, W*Cout) banded matrices B[dy].

    B[dy][cw*Cin + ci, c*Cout + co] = w[dy, dx, ci, co] with cw = c + dx - 1;
    i.e. the dx taps and the zero SAME-padding along W are folded into the
    weight, so each dy tap becomes one dense (L, L) matmul.
    """
    Cin, Cout = w_hwio.shape[2], w_hwio.shape[3]
    cols = []
    for c in range(W):
        blk = jnp.zeros((3, W * Cin, Cout), w_hwio.dtype)
        for dx in range(3):
            cw = c + dx - 1
            if 0 <= cw < W:
                blk = blk.at[:, cw * Cin:(cw + 1) * Cin, :].set(w_hwio[:, dx])
        cols.append(blk)
    return jnp.concatenate(cols, axis=-1)                       # (3, L, L)


def fused_basic_block(x_nhwc, params):
    """conv3x3-BN-ReLU-conv3x3-BN-(+x)-ReLU (eval mode), one pallas_call."""
    N, H, W, C = x_nhwc.shape
    L = W * C                                   # lane axis; 16*8 = 128 here

    # Row layout: lane index = w*C + c.
    x_rows = x_nhwc.reshape(N, H, L)

    # Layer-1 im2col along the row (dy) direction done in glue: 2-row zero
    # halo + 3 shifted copies stacked on the lane axis -> one K=3*L matmul.
    xp = jnp.pad(x_rows, ((0, 0), (2, 2), (0, 0)))              # (N, H+4, L)
    p1 = jnp.concatenate([xp[:, dy:dy + H + 2, :] for dy in range(3)],
                         axis=-1).astype(jnp.bfloat16)          # (N, H+2, 3L)

    b1w = _band_weights(params["w1"], W)                        # (3, L, L)
    w1k = jnp.concatenate([b1w[0], b1w[1], b1w[2]], axis=0)     # (3L, L)
    w2k = _band_weights(params["w2"], W)                        # (3, L, L)

    def tile_vec(v):        # per-channel -> per-lane (tiled over W), (1, L)
        return jnp.tile(v, W).reshape(1, L).astype(jnp.float32)

    args = (p1,
            w1k.astype(jnp.bfloat16),
            w2k.astype(jnp.bfloat16),
            tile_vec(params["s1"]), tile_vec(params["b1"]),
            tile_vec(params["s2"]), tile_vec(params["b2"]),
            x_rows.astype(jnp.float32))

    kernel = functools.partial(_fused_basic_block_kernel, H=H, L=L)

    out_rows = pl.pallas_call(
        kernel,
        out_shape=jax.ShapeDtypeStruct((N, H, L), jnp.float32),
        grid_spec=pltpu.PrefetchScalarGridSpec(
            num_scalar_prefetch=0,
            grid=(N,),                          # N=2 feeds both v7x cores
            in_specs=[
                pl.BlockSpec((1, H + 2, 3 * L), lambda n: (n, 0, 0)),
                pl.BlockSpec((3 * L, L), lambda n: (0, 0)),
                pl.BlockSpec((3, L, L), lambda n: (0, 0, 0)),
                pl.BlockSpec((1, L), lambda n: (0, 0)),
                pl.BlockSpec((1, L), lambda n: (0, 0)),
                pl.BlockSpec((1, L), lambda n: (0, 0)),
                pl.BlockSpec((1, L), lambda n: (0, 0)),
                pl.BlockSpec((1, H, L), lambda n: (n, 0, 0)),
            ],
            out_specs=pl.BlockSpec((1, H, L), lambda n: (n, 0, 0)),
        ),
        compiler_params=pltpu.CompilerParams(
            dimension_semantics=("parallel",)),
    )(*args)

    return out_rows.reshape(N, H, W, C)


def resnet_forward(x_nchw, length, params):
    """Matches PyTorch `Resnet.forward(x, length)`; `length` is unused."""
    del length                                  # unused, as in the PyTorch module
    x = jnp.transpose(x_nchw, (0, 2, 3, 1))     # NCHW -> NHWC   (glue)
    y = fused_basic_block(x, params)            # fused Pallas kernel
    return jnp.transpose(y, (0, 3, 1, 2))       # NHWC -> NCHW   (glue)


def _reference_forward(x_nchw, params):
    """Plain-JAX f32 reference (lax.conv) for a numerical sanity check."""
    x = jnp.transpose(x_nchw, (0, 2, 3, 1))
    dn = lax.conv_dimension_numbers(x.shape, params["w1"].shape,
                                    ("NHWC", "HWIO", "NHWC"))

    def conv(v, w):
        return lax.conv_general_dilated(v, w, (1, 1), "SAME",
                                        dimension_numbers=dn,
                                        precision=lax.Precision.HIGHEST)

    h = jnp.maximum(conv(x, params["w1"]) * params["s1"] + params["b1"], 0.0)
    y = conv(h, params["w2"]) * params["s2"] + params["b2"] + x
    y = jnp.maximum(y, 0.0)
    return jnp.transpose(y, (0, 3, 1, 2))


def _init_params(key, channels):
    k1, k2, k3, k4 = jax.random.split(key, 4)
    std = float(np.sqrt(2.0 / (9 * channels)))        # kaiming-normal fan_in
    w1 = jax.random.normal(k1, (3, 3, channels, channels), jnp.float32) * std
    w2 = jax.random.normal(k2, (3, 3, channels, channels), jnp.float32) * std
    eps = 1e-5
    gamma1 = 1.0 + 0.1 * jax.random.normal(k3, (channels,), jnp.float32)
    gamma2 = 1.0 + 0.1 * jax.random.normal(k4, (channels,), jnp.float32)
    beta = jnp.zeros((channels,), jnp.float32)
    mean = jnp.zeros((channels,), jnp.float32)
    var = jnp.ones((channels,), jnp.float32)
    s1 = gamma1 / jnp.sqrt(var + eps)
    s2 = gamma2 / jnp.sqrt(var + eps)
    return {
        "w1": w1, "s1": s1, "b1": beta - mean * s1,
        "w2": w2, "s2": s2, "b2": beta - mean * s2,
    }


if __name__ == "__main__":
    key = jax.random.PRNGKey(0)
    kx, kp = jax.random.split(key)

    N, C, H, W = 2, 8, 16, 16                          # small NCHW input
    x = jax.random.normal(kx, (N, C, H, W), jnp.float32)
    length = jnp.full((N,), H, jnp.int32)              # unused by forward
    params = _init_params(kp, C)

    out = jax.block_until_ready(resnet_forward(x, length, params))

    ref = jax.block_until_ready(_reference_forward(x, params))
    assert out.shape == (N, C, H, W)
    # bf16 matmul inputs vs f32 reference -> loose tolerance.
    np.testing.assert_allclose(np.asarray(out), np.asarray(ref),
                               rtol=5e-2, atol=5e-2)

    print("KERNEL_OK")
</pallas_src>

<mosaic_0001>
module attributes {stable_mosaic.version = 11 : i64} {
  func.func @_fused_basic_block_kernel(%arg0: i32, %arg1: memref<1x18x384xbf16, #tpu.memory_space<vmem>>, %arg2: memref<384x128xbf16, #tpu.memory_space<vmem>>, %arg3: memref<3x128x128xbf16, #tpu.memory_space<vmem>>, %arg4: memref<1x128xf32, #tpu.memory_space<vmem>>, %arg5: memref<1x128xf32, #tpu.memory_space<vmem>>, %arg6: memref<1x128xf32, #tpu.memory_space<vmem>>, %arg7: memref<1x128xf32, #tpu.memory_space<vmem>>, %arg8: memref<1x16x128xf32, #tpu.memory_space<vmem>>, %arg9: memref<1x16x128xf32, #tpu.memory_space<vmem>>) attributes {dimension_semantics = [#tpu.dimension_semantics<parallel>], iteration_bounds = array<i64: 2>, scalar_prefetch = 0 : i64, scratch_operands = 0 : i64, tpu.core_type = #tpu.core_type<tc>, window_params = [{transform_indices = @transform_0, window_bounds = array<i64: 1, 18, 384>}, {pipeline_mode = #tpu.pipeline_mode<synchronous>, transform_indices = @transform_1, window_bounds = array<i64: 384, 128>}, {pipeline_mode = #tpu.pipeline_mode<synchronous>, transform_indices = @transform_2, window_bounds = array<i64: 3, 128, 128>}, {pipeline_mode = #tpu.pipeline_mode<synchronous>, transform_indices = @transform_3, window_bounds = array<i64: 1, 128>}, {pipeline_mode = #tpu.pipeline_mode<synchronous>, transform_indices = @transform_4, window_bounds = array<i64: 1, 128>}, {pipeline_mode = #tpu.pipeline_mode<synchronous>, transform_indices = @transform_5, window_bounds = array<i64: 1, 128>}, {pipeline_mode = #tpu.pipeline_mode<synchronous>, transform_indices = @transform_6, window_bounds = array<i64: 1, 128>}, {transform_indices = @transform_7, window_bounds = array<i64: 1, 16, 128>}, {transform_indices = @transform_8, window_bounds = array<i64: 1, 16, 128>}]} {
    %c0 = arith.constant 0 : index
    %c0_0 = arith.constant 0 : index
    %c0_1 = arith.constant 0 : index
    %0 = vector.load %arg1[%c0, %c0_0, %c0_1] : memref<1x18x384xbf16, #tpu.memory_space<vmem>>, vector<1x18x384xbf16>
    %1 = vector.shape_cast %0 : vector<1x18x384xbf16> to vector<18x384xbf16>
    %c0_2 = arith.constant 0 : index
    %c0_3 = arith.constant 0 : index
    %2 = vector.load %arg2[%c0_2, %c0_3] : memref<384x128xbf16, #tpu.memory_space<vmem>>, vector<384x128xbf16>
    %cst = arith.constant dense<0.000000e+00> : vector<18x128xf32>
    %3 = tpu.matmul %1, %2, %cst {dimension_numbers = #tpu.dot_dimension_numbers<[1], [0], [0], [1], [0, 0, 1, 1], [], []>} : vector<18x384xbf16>, vector<384x128xbf16>, vector<18x128xf32> -> vector<18x128xf32>
    %c0_4 = arith.constant 0 : index
    %c0_5 = arith.constant 0 : index
    %4 = vector.load %arg4[%c0_4, %c0_5] : memref<1x128xf32, #tpu.memory_space<vmem>>, vector<1x128xf32>
    %5 = vector.shape_cast %4 : vector<1x128xf32> to vector<128xf32>
    %6 = vector.shape_cast %5 : vector<128xf32> to vector<1x128xf32>
    %7 = vector.broadcast %6 : vector<1x128xf32> to vector<18x128xf32>
    %8 = arith.mulf %3, %7 : vector<18x128xf32>
    %c0_6 = arith.constant 0 : index
    %c0_7 = arith.constant 0 : index
    %9 = vector.load %arg5[%c0_6, %c0_7] : memref<1x128xf32, #tpu.memory_space<vmem>>, vector<1x128xf32>
    %10 = vector.shape_cast %9 : vector<1x128xf32> to vector<128xf32>
    %11 = vector.shape_cast %10 : vector<128xf32> to vector<1x128xf32>
    %12 = vector.broadcast %11 : vector<1x128xf32> to vector<18x128xf32>
    %13 = arith.addf %8, %12 : vector<18x128xf32>
    %cst_8 = arith.constant 0.000000e+00 : f32
    %14 = vector.broadcast %cst_8 : f32 to vector<18x128xf32>
    %15 = arith.maximumf %13, %14 : vector<18x128xf32>
    %16 = tpu.iota {dimensions = array<i32: 0>} : vector<18x1xi32>
    %c1_i32 = arith.constant 1 : i32
    %17 = vector.broadcast %c1_i32 : i32 to vector<18x1xi32>
    %18 = arith.cmpi sge, %16, %17 : vector<18x1xi32>
    %c16_i32 = arith.constant 16 : i32
    %19 = vector.broadcast %c16_i32 : i32 to vector<18x1xi32>
    %20 = arith.cmpi sle, %16, %19 : vector<18x1xi32>
    %21 = arith.andi %18, %20 : vector<18x1xi1>
    %cst_9 = arith.constant 0.000000e+00 : f32
    %22 = vector.shape_cast %21 : vector<18x1xi1> to vector<18x1xi1>
    %23 = vector.broadcast %22 : vector<18x1xi1> to vector<18x128xi1>
    %24 = vector.broadcast %cst_9 : f32 to vector<18x128xf32>
    %25 = arith.select %23, %15, %24 : vector<18x128xi1>, vector<18x128xf32>
    %cst_10 = arith.constant 0.000000e+00 : f32
    %26 = vector.broadcast %cst_10 : f32 to vector<16x128xf32>
    %27 = vector.extract_strided_slice %25 {offsets = [0, 0], sizes = [16, 128], strides = [1, 1]} : vector<18x128xf32> to vector<16x128xf32>
    %28 = arith.truncf %27 : vector<16x128xf32> to vector<16x128xbf16>
    %c0_11 = arith.constant 0 : index
    %c0_12 = arith.constant 0 : index
    %c0_13 = arith.constant 0 : index
    %29 = vector.load %arg3[%c0_11, %c0_12, %c0_13] : memref<3x128x128xbf16, #tpu.memory_space<vmem>>, vector<1x128x128xbf16>
    %30 = vector.shape_cast %29 : vector<1x128x128xbf16> to vector<128x128xbf16>
    %cst_14 = arith.constant dense<0.000000e+00> : vector<16x128xf32>
    %31 = tpu.matmul %28, %30, %cst_14 {dimension_numbers = #tpu.dot_dimension_numbers<[1], [0], [0], [1], [0, 0, 1, 1], [], []>} : vector<16x128xbf16>, vector<128x128xbf16>, vector<16x128xf32> -> vector<16x128xf32>
    %32 = arith.addf %26, %31 : vector<16x128xf32>
    %33 = vector.extract_strided_slice %25 {offsets = [1, 0], sizes = [16, 128], strides = [1, 1]} : vector<18x128xf32> to vector<16x128xf32>
    %34 = arith.truncf %33 : vector<16x128xf32> to vector<16x128xbf16>
    %c1 = arith.constant 1 : index
    %c0_15 = arith.constant 0 : index
    %c0_16 = arith.constant 0 : index
    %35 = vector.load %arg3[%c1, %c0_15, %c0_16] : memref<3x128x128xbf16, #tpu.memory_space<vmem>>, vector<1x128x128xbf16>
    %36 = vector.shape_cast %35 : vector<1x128x128xbf16> to vector<128x128xbf16>
    %cst_17 = arith.constant dense<0.000000e+00> : vector<16x128xf32>
    %37 = tpu.matmul %34, %36, %cst_17 {dimension_numbers = #tpu.dot_dimension_numbers<[1], [0], [0], [1], [0, 0, 1, 1], [], []>} : vector<16x128xbf16>, vector<128x128xbf16>, vector<16x128xf32> -> vector<16x128xf32>
    %38 = arith.addf %32, %37 : vector<16x128xf32>
    %39 = vector.extract_strided_slice %25 {offsets = [2, 0], sizes = [16, 128], strides = [1, 1]} : vector<18x128xf32> to vector<16x128xf32>
    %40 = arith.truncf %39 : vector<16x128xf32> to vector<16x128xbf16>
    %c2 = arith.constant 2 : index
    %c0_18 = arith.constant 0 : index
    %c0_19 = arith.constant 0 : index
    %41 = vector.load %arg3[%c2, %c0_18, %c0_19] : memref<3x128x128xbf16, #tpu.memory_space<vmem>>, vector<1x128x128xbf16>
    %42 = vector.shape_cast %41 : vector<1x128x128xbf16> to vector<128x128xbf16>
    %cst_20 = arith.constant dense<0.000000e+00> : vector<16x128xf32>
    %43 = tpu.matmul %40, %42, %cst_20 {dimension_numbers = #tpu.dot_dimension_numbers<[1], [0], [0], [1], [0, 0, 1, 1], [], []>} : vector<16x128xbf16>, vector<128x128xbf16>, vector<16x128xf32> -> vector<16x128xf32>
    %44 = arith.addf %38, %43 : vector<16x128xf32>
    %c0_21 = arith.constant 0 : index
    %c0_22 = arith.constant 0 : index
    %45 = vector.load %arg6[%c0_21, %c0_22] : memref<1x128xf32, #tpu.memory_space<vmem>>, vector<1x128xf32>
    %46 = vector.shape_cast %45 : vector<1x128xf32> to vector<128xf32>
    %47 = vector.shape_cast %46 : vector<128xf32> to vector<1x128xf32>
    %48 = vector.broadcast %47 : vector<1x128xf32> to vector<16x128xf32>
    %49 = arith.mulf %44, %48 : vector<16x128xf32>
    %c0_23 = arith.constant 0 : index
    %c0_24 = arith.constant 0 : index
    %50 = vector.load %arg7[%c0_23, %c0_24] : memref<1x128xf32, #tpu.memory_space<vmem>>, vector<1x128xf32>
    %51 = vector.shape_cast %50 : vector<1x128xf32> to vector<128xf32>
    %52 = vector.shape_cast %51 : vector<128xf32> to vector<1x128xf32>
    %53 = vector.broadcast %52 : vector<1x128xf32> to vector<16x128xf32>
    %54 = arith.addf %49, %53 : vector<16x128xf32>
    %c0_25 = arith.constant 0 : index
    %c0_26 = arith.constant 0 : index
    %c0_27 = arith.constant 0 : index
    %55 = vector.load %arg8[%c0_25, %c0_26, %c0_27] : memref<1x16x128xf32, #tpu.memory_space<vmem>>, vector<1x16x128xf32>
    %56 = vector.shape_cast %55 : vector<1x16x128xf32> to vector<16x128xf32>
    %57 = arith.addf %54, %56 : vector<16x128xf32>
    %cst_28 = arith.constant 0.000000e+00 : f32
    %58 = vector.broadcast %cst_28 : f32 to vector<16x128xf32>
    %59 = arith.maximumf %57, %58 : vector<16x128xf32>
    %c0_29 = arith.constant 0 : index
    %c0_30 = arith.constant 0 : index
    %c0_31 = arith.constant 0 : index
    %60 = vector.load %arg9[%c0_29, %c0_30, %c0_31] : memref<1x16x128xf32, #tpu.memory_space<vmem>>, vector<1x16x128xf32>
    %61 = vector.shape_cast %60 : vector<1x16x128xf32> to vector<16x128xf32>
    %62 = vector.shape_cast %59 : vector<16x128xf32> to vector<1x16x128xf32>
    tpu.vector_store %arg9[%c0_29, %c0_30, %c0_31], %62 {strides = array<i32>} : memref<1x16x128xf32, #tpu.memory_space<vmem>>, vector<1x16x128xf32>,
    return
  }
  func.func @transform_0(%arg0: i32) -> (i32, i32, i32) {
    %c0_i32 = arith.constant 0 : i32
    %c0_i32_0 = arith.constant 0 : i32
    %c0_i32_1 = arith.constant 0 : i32
    return %arg0, %c0_i32, %c0_i32_0 : i32, i32, i32
  }
  func.func @transform_1(%arg0: i32) -> (i32, i32) {
    %c0_i32 = arith.constant 0 : i32
    %c0_i32_0 = arith.constant 0 : i32
    %c0_i32_1 = arith.constant 0 : i32
    return %c0_i32, %c0_i32_0 : i32, i32
  }
  func.func @transform_2(%arg0: i32) -> (i32, i32, i32) {
    %c0_i32 = arith.constant 0 : i32
    %c0_i32_0 = arith.constant 0 : i32
    %c0_i32_1 = arith.constant 0 : i32
    %c0_i32_2 = arith.constant 0 : i32
    return %c0_i32, %c0_i32_0, %c0_i32_1 : i32, i32, i32
  }
  func.func @transform_3(%arg0: i32) -> (i32, i32) {
    %c0_i32 = arith.constant 0 : i32
    %c0_i32_0 = arith.constant 0 : i32
    %c0_i32_1 = arith.constant 0 : i32
    return %c0_i32, %c0_i32_0 : i32, i32
  }
  func.func @transform_4(%arg0: i32) -> (i32, i32) {
    %c0_i32 = arith.constant 0 : i32
    %c0_i32_0 = arith.constant 0 : i32
    %c0_i32_1 = arith.constant 0 : i32
    return %c0_i32, %c0_i32_0 : i32, i32
  }
  func.func @transform_5(%arg0: i32) -> (i32, i32) {
    %c0_i32 = arith.constant 0 : i32
    %c0_i32_0 = arith.constant 0 : i32
    %c0_i32_1 = arith.constant 0 : i32
    return %c0_i32, %c0_i32_0 : i32, i32
  }
  func.func @transform_6(%arg0: i32) -> (i32, i32) {
    %c0_i32 = arith.constant 0 : i32
    %c0_i32_0 = arith.constant 0 : i32
    %c0_i32_1 = arith.constant 0 : i32
    return %c0_i32, %c0_i32_0 : i32, i32
  }
  func.func @transform_7(%arg0: i32) -> (i32, i32, i32) {
    %c0_i32 = arith.constant 0 : i32
    %c0_i32_0 = arith.constant 0 : i32
    %c0_i32_1 = arith.constant 0 : i32
    return %arg0, %c0_i32, %c0_i32_0 : i32, i32, i32
  }
  func.func @transform_8(%arg0: i32) -> (i32, i32, i32) {
    %c0_i32 = arith.constant 0 : i32
    %c0_i32_0 = arith.constant 0 : i32
    %c0_i32_1 = arith.constant 0 : i32
    return %arg0, %c0_i32, %c0_i32_0 : i32, i32, i32
  }
}

</mosaic_0001>

<llo_original>
// kernel: tpu_custom_call.1
$region0: #{tpu_custom_call.1}
  #allocation0 [shape = 'u32[]', space=smem, size = 0x4, offset = 0x4, fixed_abs, tag = 'smem constant byte address 0x4 - core index']
  #allocation1 [shape = 'u32[144,128]{1,0:T(1,128)}', space=vmem, size = 0x12000, scoped, tag = 'internal scratch']
  %s0 = inlined_call_operand.vmem [shape: bf16[2,18,384], index: 0, kind: input, shape index: {}]
  %s1 = inlined_call_operand.hbm [shape: bf16[384,128], index: 1, kind: input, shape index: {}]
  %s2 = inlined_call_operand.hbm [shape: bf16[3,128,128], index: 2, kind: input, shape index: {}]
  %s3 = inlined_call_operand.vmem [shape: f32[1,128], index: 3, kind: input, shape index: {}]
  %s4 = inlined_call_operand.vmem [shape: f32[1,128], index: 4, kind: input, shape index: {}]
  %s5 = inlined_call_operand.vmem [shape: f32[1,128], index: 5, kind: input, shape index: {}]
  %s6 = inlined_call_operand.vmem [shape: f32[1,128], index: 6, kind: input, shape index: {}]
  %s7 = inlined_call_operand.vmem [shape: f32[2,16,128], index: 7, kind: input, shape index: {}]
  %s8 = inlined_call_operand.hbm [shape: f32[2,16,128], index: 8, kind: output, shape index: {}]
  %s9 = sld [smem:[#allocation0]]
  $region73: #{tpu_custom_call.1} parent=0
    _
  %s11 = ssub.s32 1, %s9
  %s12 = scalar_select 0, %s11, %s9
  $region1: #{tpu_custom_call.1} parent=0
    #allocation2 [shape = 'u8[98304]{0}', space=vmem, size = 0x18000, scoped, tag = 'input window, operand 1, single buffered']
    #allocation3 [shape = 's32[2]{0}', space=sflag, size = 0x8, scoped, tag = 'scoped memory for tpu_custom_call.1']
    #allocation4 [shape = 's32[2]{0}', space=sflag, size = 0x8, scoped, tag = 'scoped memory for tpu_custom_call.1']
    #allocation5 [shape = 'u8[98304]{0}', space=vmem, size = 0x18000, scoped, tag = 'input window, operand 2, single buffered']
    #allocation6 [shape = 's32[1]{0}', space=sflag, size = 0x4, scoped, tag = 'scoped memory for tpu_custom_call.1']
    #allocation7 [shape = 'u8[16384]{0}', space=vmem, size = 0x4000, scoped, tag = 'output window, operand 0']
    %13 = vsyncpa [#allocation3], 0
    %14 = vsyncpa [#allocation6], 0
    %15 = vsyncpa [#allocation4], 0
    %s16 = scalar_lea.sflag [#allocation4], 1
    %17 = vsyncpa %s16, 0
    loop: start=0, step=1, limit=4
    $region2: #{tpu_custom_call.1} parent=1 // loop_pre_header
      _
    $region3: #{tpu_custom_call.1} parent=1 // loop_header
      %s19 = sphi 0, %s23
      %p20 = scmp.ge.s32.totalorder %s19, 4
      %s29 = sphi 0, %s31
      %s32 = sphi 0, %s29
      %s33 = sphi 0, %s32
      %s49 = sphi 0, %s33
      %s53 = sphi 0, %s53
      %s55 = sphi 0, %s53
      %s56 = sphi 0, %s55
      %s70 = sphi 0, %s56
      %s74 = sphi 0, %s74
      %s76 = sphi 0, %s74
      %s77 = sphi 0, %s76
      %s91 = sphi 0, %s77
      %s95 = sphi 0, %s95
      %s97 = sphi 0, %s95
      %s98 = sphi 0, %s97
      %s112 = sphi 0, %s98
      %s116 = sphi 0, %s116
      %s118 = sphi 0, %s116
      %s119 = sphi 0, %s118
      %s133 = sphi 0, %s119
      %s137 = sphi 0, %s137
      %s139 = sphi 0, %s137
      %s140 = sphi 0, %s139
      %s154 = sphi 0, %s140
      %s158 = sphi 0, %s158
      %s160 = sphi 0, %s158
      %s161 = sphi 0, %s160
      %s175 = sphi 0, %s161
      %s181 = sphi 0, %s183
      %s184 = sphi 0, %s181
      %s185 = sphi 0, %s184
      %s201 = sphi 0, %s185
      %s207 = sphi 0, %s209
      %s210 = sphi 0, %s207
      %s211 = sphi 0, %s210
      %s227 = sphi 0, %s211
    $region4: #{tpu_custom_call.1} parent=1 // loop_header_branch
      %22 = sbr.rel (%p20) target = $region8
    $region5: #{tpu_custom_call.1} parent=1 // loop_body
      %s24 = ssub.s32 %s19, 1
      %s25 = ssub.s32 %s19, 2
      %s26 = sadd.s32 %s19, 1
      %s27 = ssub.s32 %s19, %s26
      %p28 = scmp.eq.s32.totalorder %s27, 0
      %s30 = sadd.s32 %s29, 1
      %s31 = scalar_select %p28, %s29, %s30
      %p34 = pneg %p28
      %p35 = scmp.eq.s32.totalorder %s19, 1
      %p36 = por %p34, %p35
      %p37 = scmp.ne.s32.totalorder %s29, %s32
      %p38 = scmp.eq.s32.totalorder %s19, 0
      %p39 = por %p37, %p38
      %p40 = scmp.ne.s32.totalorder %s29, %s32
      %p41 = scmp.eq.s32.totalorder %s24, 1
      %p42 = por %p40, %p41
      %p43 = scmp.ne.s32.totalorder %s32, %s33
      %p44 = scmp.eq.s32.totalorder %s24, 0
      %p45 = por %p43, %p44
      %p46 = scmp.ne.s32.totalorder %s32, %s33
      %p47 = scmp.eq.s32.totalorder %s25, 1
      %p48 = por %p46, %p47
      %p50 = scmp.ne.s32.totalorder %s33, %s49
      %p51 = scmp.eq.s32.totalorder %s25, 0
      %p52 = por %p50, %p51
      %s54 = sadd.s32 %s53, 1
      %p57 = scmp.eq.s32.totalorder %s19, 1
      %p58 = scmp.ne.s32.totalorder %s53, %s55
      %p59 = scmp.eq.s32.totalorder %s19, 0
      %p60 = por %p58, %p59
      %p61 = scmp.ne.s32.totalorder %s53, %s55
      %p62 = scmp.eq.s32.totalorder %s24, 1
      %p63 = por %p61, %p62
      %p64 = scmp.ne.s32.totalorder %s55, %s56
      %p65 = scmp.eq.s32.totalorder %s24, 0
      %p66 = por %p64, %p65
      %p67 = scmp.ne.s32.totalorder %s55, %s56
      %p68 = scmp.eq.s32.totalorder %s25, 1
      %p69 = por %p67, %p68
      %p71 = scmp.ne.s32.totalorder %s56, %s70
      %p72 = scmp.eq.s32.totalorder %s25, 0
      %p73 = por %p71, %p72
      %s75 = sadd.s32 %s74, 1
      %p78 = scmp.eq.s32.totalorder %s19, 1
      %p79 = scmp.ne.s32.totalorder %s74, %s76
      %p80 = scmp.eq.s32.totalorder %s19, 0
      %p81 = por %p79, %p80
      %p82 = scmp.ne.s32.totalorder %s74, %s76
      %p83 = scmp.eq.s32.totalorder %s24, 1
      %p84 = por %p82, %p83
      %p85 = scmp.ne.s32.totalorder %s76, %s77
      %p86 = scmp.eq.s32.totalorder %s24, 0
      %p87 = por %p85, %p86
      %p88 = scmp.ne.s32.totalorder %s76, %s77
      %p89 = scmp.eq.s32.totalorder %s25, 1
      %p90 = por %p88, %p89
      %p92 = scmp.ne.s32.totalorder %s77, %s91
      %p93 = scmp.eq.s32.totalorder %s25, 0
      %p94 = por %p92, %p93
      %s96 = sadd.s32 %s95, 1
      %p99 = scmp.eq.s32.totalorder %s19, 1
      %p100 = scmp.ne.s32.totalorder %s95, %s97
      %p101 = scmp.eq.s32.totalorder %s19, 0
      %p102 = por %p100, %p101
      %p103 = scmp.ne.s32.totalorder %s95, %s97
      %p104 = scmp.eq.s32.totalorder %s24, 1
      %p105 = por %p103, %p104
      %p106 = scmp.ne.s32.totalorder %s97, %s98
      %p107 = scmp.eq.s32.totalorder %s24, 0
      %p108 = por %p106, %p107
      %p109 = scmp.ne.s32.totalorder %s97, %s98
      %p110 = scmp.eq.s32.totalorder %s25, 1
      %p111 = por %p109, %p110
      %p113 = scmp.ne.s32.totalorder %s98, %s112
      %p114 = scmp.eq.s32.totalorder %s25, 0
      %p115 = por %p113, %p114
      %s117 = sadd.s32 %s116, 1
      %p120 = scmp.eq.s32.totalorder %s19, 1
      %p121 = scmp.ne.s32.totalorder %s116, %s118
      %p122 = scmp.eq.s32.totalorder %s19, 0
      %p123 = por %p121, %p122
      %p124 = scmp.ne.s32.totalorder %s116, %s118
      %p125 = scmp.eq.s32.totalorder %s24, 1
      %p126 = por %p124, %p125
      %p127 = scmp.ne.s32.totalorder %s118, %s119
      %p128 = scmp.eq.s32.totalorder %s24, 0
      %p129 = por %p127, %p128
      %p130 = scmp.ne.s32.totalorder %s118, %s119
      %p131 = scmp.eq.s32.totalorder %s25, 1
      %p132 = por %p130, %p131
      %p134 = scmp.ne.s32.totalorder %s119, %s133
      %p135 = scmp.eq.s32.totalorder %s25, 0
      %p136 = por %p134, %p135
      %s138 = sadd.s32 %s137, 1
      %p141 = scmp.eq.s32.totalorder %s19, 1
      %p142 = scmp.ne.s32.totalorder %s137, %s139
      %p143 = scmp.eq.s32.totalorder %s19, 0
      %p144 = por %p142, %p143
      %p145 = scmp.ne.s32.totalorder %s137, %s139
      %p146 = scmp.eq.s32.totalorder %s24, 1
      %p147 = por %p145, %p146
      %p148 = scmp.ne.s32.totalorder %s139, %s140
      %p149 = scmp.eq.s32.totalorder %s24, 0
      %p150 = por %p148, %p149
      %p151 = scmp.ne.s32.totalorder %s139, %s140
      %p152 = scmp.eq.s32.totalorder %s25, 1
      %p153 = por %p151, %p152
      %p155 = scmp.ne.s32.totalorder %s140, %s154
      %p156 = scmp.eq.s32.totalorder %s25, 0
      %p157 = por %p155, %p156
      %s159 = sadd.s32 %s158, 1
      %p162 = scmp.eq.s32.totalorder %s19, 1
      %p163 = scmp.ne.s32.totalorder %s158, %s160
      %p164 = scmp.eq.s32.totalorder %s19, 0
      %p165 = por %p163, %p164
      %p166 = scmp.ne.s32.totalorder %s158, %s160
      %p167 = scmp.eq.s32.totalorder %s24, 1
      %p168 = por %p166, %p167
      %p169 = scmp.ne.s32.totalorder %s160, %s161
      %p170 = scmp.eq.s32.totalorder %s24, 0
      %p171 = por %p169, %p170
      %p172 = scmp.ne.s32.totalorder %s160, %s161
      %p173 = scmp.eq.s32.totalorder %s25, 1
      %p174 = por %p172, %p173
      %p176 = scmp.ne.s32.totalorder %s161, %s175
      %p177 = scmp.eq.s32.totalorder %s25, 0
      %p178 = por %p176, %p177
      %s179 = ssub.s32 %s19, %s26
      %p180 = scmp.eq.s32.totalorder %s179, 0
      %s182 = sadd.s32 %s181, 1
      %s183 = scalar_select %p180, %s181, %s182
      %p186 = pneg %p180
      %p187 = scmp.eq.s32.totalorder %s19, 1
      %p188 = por %p186, %p187
      %p189 = scmp.ne.s32.totalorder %s181, %s184
      %p190 = scmp.eq.s32.totalorder %s19, 0
      %p191 = por %p189, %p190
      %p192 = scmp.ne.s32.totalorder %s181, %s184
      %p193 = scmp.eq.s32.totalorder %s24, 1
      %p194 = por %p192, %p193
      %p195 = scmp.ne.s32.totalorder %s184, %s185
      %p196 = scmp.eq.s32.totalorder %s24, 0
      %p197 = por %p195, %p196
      %p198 = scmp.ne.s32.totalorder %s184, %s185
      %p199 = scmp.eq.s32.totalorder %s25, 1
      %p200 = por %p198, %p199
      %p202 = scmp.ne.s32.totalorder %s185, %s201
      %p203 = scmp.eq.s32.totalorder %s25, 0
      %p204 = por %p202, %p203
      %s205 = ssub.s32 %s19, %s26
      %p206 = scmp.eq.s32.totalorder %s205, 0
      %s208 = sadd.s32 %s207, 1
      %s209 = scalar_select %p206, %s207, %s208
      %p212 = pneg %p206
      %p213 = scmp.eq.s32.totalorder %s19, 1
      %p214 = por %p212, %p213
      %p215 = scmp.ne.s32.totalorder %s207, %s210
      %p216 = scmp.eq.s32.totalorder %s19, 0
      %p217 = por %p215, %p216
      %p218 = scmp.ne.s32.totalorder %s207, %s210
      %p219 = scmp.eq.s32.totalorder %s24, 1
      %p220 = por %p218, %p219
      %p221 = scmp.ne.s32.totalorder %s210, %s211
      %p222 = scmp.eq.s32.totalorder %s24, 0
      %p223 = por %p221, %p222
      %p224 = scmp.ne.s32.totalorder %s210, %s211
      %p225 = scmp.eq.s32.totalorder %s25, 1
      %p226 = por %p224, %p225
      %p228 = scmp.ne.s32.totalorder %s211, %s227
      %p229 = scmp.eq.s32.totalorder %s25, 0
      %p230 = por %p228, %p229
      %p231 = scmp.le.s32.totalorder 1, %s19
      %p232 = scmp.lt.s32.totalorder %s19, 3
      %p233 = pnand %p231, %p232
      %p234 = pneg %p233
      // Predicated region
      $region9: #{tpu_custom_call.1} parent=5 // pred_check
        _
      $region10: #{tpu_custom_call.1} parent=5 // pred_check_branch
        %236 = sbr.rel (%p233) target = $region12
      $region11: #{tpu_custom_call.1} parent=5 // pred_region
        %s237 = ssub.s32 %s19, 1
        // Predicated region
        $region13: #{tpu_custom_call.1} parent=11 // pred_check
          %p238 = pneg %p66
        $region14: #{tpu_custom_call.1} parent=11 // pred_check_branch
          %240 = sbr.rel (%p238) target = $region16
        $region15: #{tpu_custom_call.1} parent=11 // pred_region
          %s242 = ssub.s32 3072, 3072
          %243 = vsyncadd [#allocation3], %s242
          %s244 = sshll.u32 [#allocation2], 4
          %s245 = int_to_ptr.vmem [resolvable:$true] %s244
          %250 = dma.hbm_to_vmem [thread:$0]  %s1, 3072, %s245, [#allocation3], 64, 64, 4
        $region16: #{tpu_custom_call.1} parent=11 // pred_fallthru
          _
        // Predicated region
        $region17: #{tpu_custom_call.1} parent=11 // pred_check
          %p251 = pneg %p87
        $region18: #{tpu_custom_call.1} parent=11 // pred_check_branch
          %253 = sbr.rel (%p251) target = $region20
        $region19: #{tpu_custom_call.1} parent=11 // pred_region
          %s255 = ssub.s32 3072, 3072
          %256 = vsyncadd [#allocation6], %s255
          %s257 = sshll.u32 [#allocation5], 4
          %s258 = int_to_ptr.vmem [resolvable:$true] %s257
          %263 = dma.hbm_to_vmem [thread:$0]  %s2, 3072, %s258, [#allocation6], 64, 64, 4
        $region20: #{tpu_custom_call.1} parent=11 // pred_fallthru
          _
        // Predicated region
        $region21: #{tpu_custom_call.1} parent=11 // pred_check
          %p264 = pneg %p108
        $region22: #{tpu_custom_call.1} parent=11 // pred_check_branch
          %266 = sbr.rel (%p264) target = $region24
        $region23: #{tpu_custom_call.1} parent=11 // pred_region
          _
        $region24: #{tpu_custom_call.1} parent=11 // pred_fallthru
          _
        // Predicated region
        $region25: #{tpu_custom_call.1} parent=11 // pred_check
          %p267 = pneg %p129
        $region26: #{tpu_custom_call.1} parent=11 // pred_check_branch
          %269 = sbr.rel (%p267) target = $region28
        $region27: #{tpu_custom_call.1} parent=11 // pred_region
          _
        $region28: #{tpu_custom_call.1} parent=11 // pred_fallthru
          _
        // Predicated region
        $region29: #{tpu_custom_call.1} parent=11 // pred_check
          %p270 = pneg %p150
        $region30: #{tpu_custom_call.1} parent=11 // pred_check_branch
          %272 = sbr.rel (%p270) target = $region32
        $region31: #{tpu_custom_call.1} parent=11 // pred_region
          _
        $region32: #{tpu_custom_call.1} parent=11 // pred_fallthru
          _
        // Predicated region
        $region33: #{tpu_custom_call.1} parent=11 // pred_check
          %p273 = pneg %p171
        $region34: #{tpu_custom_call.1} parent=11 // pred_check_branch
          %275 = sbr.rel (%p273) target = $region36
        $region35: #{tpu_custom_call.1} parent=11 // pred_region
          _
        $region36: #{tpu_custom_call.1} parent=11 // pred_fallthru
          _
      $region12: #{tpu_custom_call.1} parent=5 // pred_fallthru
        _
      %p276 = scmp.lt.s32.totalorder %s19, 2
      // Predicated region
      $region37: #{tpu_custom_call.1} parent=5 // pred_check
        %p277 = pneg %p276
      $region38: #{tpu_custom_call.1} parent=5 // pred_check_branch
        %279 = sbr.rel (%p277) target = $region40
      $region39: #{tpu_custom_call.1} parent=5 // pred_region
        // Predicated region
        $region41: #{tpu_custom_call.1} parent=39 // pred_check
          %p280 = pneg %p39
        $region42: #{tpu_custom_call.1} parent=39 // pred_check_branch
          %282 = sbr.rel (%p280) target = $region44
        $region43: #{tpu_custom_call.1} parent=39 // pred_region
          %p283 = scmp.lt.s32.totalorder %s19, 1
          %s284 = scalar_select %p283, %s19, 1
          %s285 = smul.addr %s284, 9
          %s286 = smul.addr %s285, 4
          %s287 = scalar_lea.vmem %s0, %s286
        $region44: #{tpu_custom_call.1} parent=39 // pred_fallthru
          _
        // Predicated region
        $region45: #{tpu_custom_call.1} parent=39 // pred_check
          %p288 = pneg %p191
        $region46: #{tpu_custom_call.1} parent=39 // pred_check_branch
          %290 = sbr.rel (%p288) target = $region48
        $region47: #{tpu_custom_call.1} parent=39 // pred_region
          %p291 = scmp.lt.s32.totalorder %s19, 1
          %s292 = scalar_select %p291, %s19, 1
          %s293 = smul.addr %s292, 2
          %s294 = smul.addr %s293, 8
          %s295 = scalar_lea.vmem %s7, %s294
        $region48: #{tpu_custom_call.1} parent=39 // pred_fallthru
          _
      $region40: #{tpu_custom_call.1} parent=5 // pred_fallthru
        _
      %p296 = scmp.le.s32.totalorder 1, %s19
      %p297 = scmp.lt.s32.totalorder %s19, 3
      %p298 = pnand %p296, %p297
      %p299 = pneg %p298
      // Predicated region
      $region49: #{tpu_custom_call.1} parent=5 // pred_check
        _
      $region50: #{tpu_custom_call.1} parent=5 // pred_check_branch
        %301 = sbr.rel (%p298) target = $region52
      $region51: #{tpu_custom_call.1} parent=5 // pred_region
        %s302 = ssub.s32 %s19, 1
        // Predicated region
        $region53: #{tpu_custom_call.1} parent=51 // pred_check
          %p303 = pneg %p66
        $region54: #{tpu_custom_call.1} parent=51 // pred_check_branch
          %305 = sbr.rel (%p303) target = $region56
        $region55: #{tpu_custom_call.1} parent=51 // pred_region
          %306 = dma.done [#allocation3], 3072
        $region56: #{tpu_custom_call.1} parent=51 // pred_fallthru
          _
        // Predicated region
        $region57: #{tpu_custom_call.1} parent=51 // pred_check
          %p307 = pneg %p87
        $region58: #{tpu_custom_call.1} parent=51 // pred_check_branch
          %309 = sbr.rel (%p307) target = $region60
        $region59: #{tpu_custom_call.1} parent=51 // pred_region
          %310 = dma.done [#allocation6], 3072
        $region60: #{tpu_custom_call.1} parent=51 // pred_fallthru
          _
        %p311 = scmp.lt.s32.totalorder %s24, 1
        %s312 = scalar_select %p311, %s24, 1
        %s313 = smul.addr %s312, 9
        %s314 = smul.addr %s313, 4
        %s315 = scalar_lea.vmem %s0, %s314
        %p316 = pneg %p45
        %p317 = pneg %p42
        %p318 = pneg %p66
        %p319 = pneg %p63
        %p320 = pneg %p87
        %p321 = pneg %p84
        %p322 = pneg %p108
        %p323 = pneg %p105
        %p324 = pneg %p129
        %p325 = pneg %p126
        %p326 = pneg %p150
        %p327 = pneg %p147
        %p328 = pneg %p171
        %p329 = pneg %p168
        %p330 = scmp.lt.s32.totalorder %s24, 1
        %s331 = scalar_select %p330, %s24, 1
        %s332 = smul.addr %s331, 2
        %s333 = smul.addr %s332, 8
        %s334 = scalar_lea.vmem %s7, %s333
        %p335 = pneg %p197
        %p336 = pneg %p194
        %p337 = pneg %p223
        %p338 = pneg %p220
        %s339 = sand.u32 %s210, 1
        %s340 = scalar_lea.sflag [#allocation4], %s339
        %s341 = sand.u32 %s210, 1
        %s342 = smul.addr %s341, 16
        %s343 = scalar_lea.vmem [#allocation7], %s342
        %p344 = scmp.lt.s32.totalorder %s24, 1
        %s345 = scalar_select %p344, %s24, 1
        %s346 = smul.addr %s345, 9
        %s347 = smul.addr %s346, 4
        %s348 = scalar_lea.vmem %s0, %s347
        %p349 = scmp.lt.s32.totalorder %s24, 1
        %s350 = scalar_select %p349, %s24, 1
        %s351 = smul.addr %s350, 2
        %s352 = smul.addr %s351, 8
        %s353 = scalar_lea.vmem %s7, %s352
        %v355 = vld [vmem:[%s348] sm:$0xff]
        %v356 = vld [vmem:[%s348 + $0x8] sm:$0xf]
        %v357 = vld [vmem:[%s348 + $0xc] sm:$0xff]
        %v358 = vld [vmem:[%s348 + $0x14] sm:$0xf]
        %v359 = vld [vmem:[%s348 + $0x18] sm:$0x11]
        %v360 = vld [vmem:[%s348 + $0x20] sm:$0x1]
        %v361 = vld [vmem:[#allocation2] sm:$0xf]
        %v362 = vld [vmem:[#allocation2 + $0x4] sm:$0xf]
        %v363 = vld [vmem:[#allocation2 + $0x8] sm:$0xf]
        %v364 = vld [vmem:[#allocation2 + $0xc] sm:$0xf]
        %v365 = vld [vmem:[#allocation2 + $0x10] sm:$0xf]
        %v366 = vld [vmem:[#allocation2 + $0x14] sm:$0xf]
        %v367 = vld [vmem:[#allocation2 + $0x18] sm:$0xf]
        %v368 = vld [vmem:[#allocation2 + $0x1c] sm:$0xf]
        %v369 = vld [vmem:[#allocation2 + $0x20] sm:$0xf]
        %v370 = vld [vmem:[#allocation2 + $0x24] sm:$0xf]
        %v371 = vld [vmem:[#allocation2 + $0x28] sm:$0xf]
        %v372 = vld [vmem:[#allocation2 + $0x2c] sm:$0xf]
        %v373 = vld [vmem:[#allocation2 + $0x30] sm:$0xf]
        %v374 = vld [vmem:[#allocation2 + $0x34] sm:$0xf]
        %v375 = vld [vmem:[#allocation2 + $0x38] sm:$0xf]
        %v376 = vld [vmem:[#allocation2 + $0x3c] sm:$0xf]
        %v377 = vld [vmem:[#allocation2 + $0x40] sm:$0xf]
        %v378 = vld [vmem:[#allocation2 + $0x44] sm:$0xf]
        %v379 = vld [vmem:[#allocation2 + $0x48] sm:$0xf]
        %v380 = vld [vmem:[#allocation2 + $0x4c] sm:$0xf]
        %v381 = vld [vmem:[#allocation2 + $0x50] sm:$0xf]
        %v382 = vld [vmem:[#allocation2 + $0x54] sm:$0xf]
        %v383 = vld [vmem:[#allocation2 + $0x58] sm:$0xf]
        %v384 = vld [vmem:[#allocation2 + $0x5c] sm:$0xf]
        %v385 = vld [vmem:[#allocation2 + $0x60] sm:$0xf]
        %v386 = vld [vmem:[#allocation2 + $0x64] sm:$0xf]
        %v387 = vld [vmem:[#allocation2 + $0x68] sm:$0xf]
        %v388 = vld [vmem:[#allocation2 + $0x6c] sm:$0xf]
        %v389 = vld [vmem:[#allocation2 + $0x70] sm:$0xf]
        %v390 = vld [vmem:[#allocation2 + $0x74] sm:$0xf]
        %v391 = vld [vmem:[#allocation2 + $0x78] sm:$0xf]
        %v392 = vld [vmem:[#allocation2 + $0x7c] sm:$0xf]
        %v393 = vld [vmem:[#allocation2 + $0x80] sm:$0xf]
        %v394 = vld [vmem:[#allocation2 + $0x84] sm:$0xf]
        %v395 = vld [vmem:[#allocation2 + $0x88] sm:$0xf]
        %v396 = vld [vmem:[#allocation2 + $0x8c] sm:$0xf]
        %v397 = vld [vmem:[#allocation2 + $0x90] sm:$0xf]
        %v398 = vld [vmem:[#allocation2 + $0x94] sm:$0xf]
        %v399 = vld [vmem:[#allocation2 + $0x98] sm:$0xf]
        %v400 = vld [vmem:[#allocation2 + $0x9c] sm:$0xf]
        %v401 = vld [vmem:[#allocation2 + $0xa0] sm:$0xf]
        %v402 = vld [vmem:[#allocation2 + $0xa4] sm:$0xf]
        %v403 = vld [vmem:[#allocation2 + $0xa8] sm:$0xf]
        %v404 = vld [vmem:[#allocation2 + $0xac] sm:$0xf]
        %v405 = vld [vmem:[#allocation2 + $0xb0] sm:$0xf]
        %v406 = vld [vmem:[#allocation2 + $0xb4] sm:$0xf]
        %v407 = vld [vmem:[#allocation2 + $0xb8] sm:$0xf]
        %v408 = vld [vmem:[#allocation2 + $0xbc] sm:$0xf]
        %v415 = vunpack.c.l.b16 %v355
        %v416 = vunpack.c.h.b16 %v355
        %v417 = vunpack.c.l.b16 %v356
        %v418 = vunpack.c.l.b16 %v357
        %v419 = vunpack.c.h.b16 %v357
        %v420 = vunpack.c.l.b16 %v358
        %v421 = vunpack.c.l.b16 %v359
        %v422 = vunpack.c.h.b16 %v359
        %v423 = vunpack.c.l.b16 %v360
        %v424 = vpack.c.b16 %v418, %v415
        %v425 = vpack.c.b16 %v419, %v416
        %v426 = vpack.c.b16 %v420, %v417
        %v427 = vpack.c.b16 %v421, %v421
        %v428 = vpack.c.b16 %v422, %v422
        %v429 = vpack.c.b16 %v423, %v423
        %v484 = vunpack.c.l.b16 %v361
        %v485 = vunpack.c.l.b16 %v362
        %v486 = vunpack.c.l.b16 %v363
        %v487 = vunpack.c.l.b16 %v364
        %v488 = vunpack.c.l.b16 %v365
        %v489 = vunpack.c.l.b16 %v366
        %v490 = vunpack.c.l.b16 %v367
        %v491 = vunpack.c.l.b16 %v368
        %v492 = vunpack.c.l.b16 %v369
        %v493 = vunpack.c.l.b16 %v370
        %v494 = vunpack.c.l.b16 %v371
        %v495 = vunpack.c.l.b16 %v372
        %v496 = vunpack.c.l.b16 %v373
        %v497 = vunpack.c.l.b16 %v374
        %v498 = vunpack.c.l.b16 %v375
        %v499 = vunpack.c.l.b16 %v376
        %v500 = vunpack.c.l.b16 %v377
        %v501 = vunpack.c.l.b16 %v378
        %v502 = vunpack.c.l.b16 %v379
        %v503 = vunpack.c.l.b16 %v380
        %v504 = vunpack.c.l.b16 %v381
        %v505 = vunpack.c.l.b16 %v382
        %v506 = vunpack.c.l.b16 %v383
        %v507 = vunpack.c.l.b16 %v384
        %v508 = vunpack.c.l.b16 %v385
        %v509 = vunpack.c.l.b16 %v386
        %v510 = vunpack.c.l.b16 %v387
        %v511 = vunpack.c.l.b16 %v388
        %v512 = vunpack.c.l.b16 %v389
        %v513 = vunpack.c.l.b16 %v390
        %v514 = vunpack.c.l.b16 %v391
        %v515 = vunpack.c.l.b16 %v392
        %v516 = vunpack.c.l.b16 %v393
        %v517 = vunpack.c.l.b16 %v394
        %v518 = vunpack.c.l.b16 %v395
        %v519 = vunpack.c.l.b16 %v396
        %v520 = vunpack.c.l.b16 %v397
        %v521 = vunpack.c.l.b16 %v398
        %v522 = vunpack.c.l.b16 %v399
        %v523 = vunpack.c.l.b16 %v400
        %v524 = vunpack.c.l.b16 %v401
        %v525 = vunpack.c.l.b16 %v402
        %v526 = vunpack.c.l.b16 %v403
        %v527 = vunpack.c.l.b16 %v404
        %v528 = vunpack.c.l.b16 %v405
        %v529 = vunpack.c.l.b16 %v406
        %v530 = vunpack.c.l.b16 %v407
        %v531 = vunpack.c.l.b16 %v408
        %v532 = vpack.c.b16 %v485, %v484
        %v533 = vpack.c.b16 %v487, %v486
        %v534 = vpack.c.b16 %v489, %v488
        %v535 = vpack.c.b16 %v491, %v490
        %v536 = vpack.c.b16 %v493, %v492
        %v537 = vpack.c.b16 %v495, %v494
        %v538 = vpack.c.b16 %v497, %v496
        %v539 = vpack.c.b16 %v499, %v498
        %v540 = vpack.c.b16 %v501, %v500
        %v541 = vpack.c.b16 %v503, %v502
        %v542 = vpack.c.b16 %v505, %v504
        %v543 = vpack.c.b16 %v507, %v506
        %v544 = vpack.c.b16 %v509, %v508
        %v545 = vpack.c.b16 %v511, %v510
        %v546 = vpack.c.b16 %v513, %v512
        %v547 = vpack.c.b16 %v515, %v514
        %v548 = vpack.c.b16 %v517, %v516
        %v549 = vpack.c.b16 %v519, %v518
        %v550 = vpack.c.b16 %v521, %v520
        %v551 = vpack.c.b16 %v523, %v522
        %v552 = vpack.c.b16 %v525, %v524
        %v553 = vpack.c.b16 %v527, %v526
        %v554 = vpack.c.b16 %v529, %v528
        %v555 = vpack.c.b16 %v531, %v530
        %580 = vmatprep.subr.bf16.mxu0 0
        %581 = vmatpush1.bf16.msra.mxu0 %v539
        %582 = vmatprep.subr.bf16.mxu0 0
        %583 = vmatpush1.bf16.msra.mxu0 %v538
        %584 = vmatprep.subr.bf16.mxu0 0
        %585 = vmatpush1.bf16.msra.mxu0 %v537
        %586 = vmatprep.subr.bf16.mxu0 0
        %587 = vmatpush1.bf16.msra.mxu0 %v536
        %588 = vmatprep.subr.bf16.mxu0 0
        %589 = vmatpush1.bf16.msra.mxu0 %v535
        %590 = vmatprep.subr.bf16.mxu0 0
        %591 = vmatpush1.bf16.msra.mxu0 %v534
        %592 = vmatprep.subr.bf16.mxu0 0
        %593 = vmatpush1.bf16.msra.mxu0 %v533
        %594 = vmatprep.subr.bf16.mxu0 0
        %595 = vmatpush1.bf16.msra.mxu0 %v532
        %596 = vmatprep.subr.bf16.mxu0 0
        %597 = vmatpush2.bf16.msra.mxu0 %v547
        %598 = vmatprep.subr.bf16.mxu0 0
        %599 = vmatpush2.bf16.msra.mxu0 %v546
        %600 = vmatprep.subr.bf16.mxu0 0
        %601 = vmatpush2.bf16.msra.mxu0 %v545
        %602 = vmatprep.subr.bf16.mxu0 0
        %603 = vmatpush2.bf16.msra.mxu0 %v544
        %604 = vmatprep.subr.bf16.mxu0 0
        %605 = vmatpush2.bf16.msra.mxu0 %v543
        %606 = vmatprep.subr.bf16.mxu0 0
        %607 = vmatpush2.bf16.msra.mxu0 %v542
        %608 = vmatprep.subr.bf16.mxu0 0
        %609 = vmatpush2.bf16.msra.mxu0 %v541
        %610 = vmatprep.subr.bf16.mxu0 0
        %611 = vmatpush2.bf16.msra.mxu0 %v540
        %612 = vmatprep.mubr.bf16.mxu0 %v425
        %613 = vmatmul.mubr.bf16.gmra.mxu0 %v424
        %v614 = vpop.f32.mrf.mxu0
        %v615 = vadd.f32 0.0, %v614
        %v616 = vpop.f32.mrf.mxu0
        %v617 = vpop.f32.mrf.mxu0
        %v618 = vadd.f32 0.0, %v617
        %v619 = vpop.f32.mrf.mxu0
        %620 = vmatprep.mubr.bf16.mxu0 %v428
        %621 = vmatmul.mubr.bf16.gmra.mxu0 %v427
        %v622 = vpop.f32.mrf.mxu0
        %v623 = vadd.f32 0.0, %v622
        %v624 = vpop.f32.mrf.mxu0
        %v625 = vpop.f32.mrf.mxu0
        %v626 = vpop.f32.mrf.mxu0
        %627 = vdwg.mxu0
        %628 = vmatprep.subr.bf16.mxu0 0
        %629 = vmatpush1.bf16.msra.mxu0 %v555
        %630 = vmatprep.subr.bf16.mxu0 0
        %631 = vmatpush1.bf16.msra.mxu0 %v554
        %632 = vmatprep.subr.bf16.mxu0 0
        %633 = vmatpush1.bf16.msra.mxu0 %v553
        %634 = vmatprep.subr.bf16.mxu0 0
        %635 = vmatpush1.bf16.msra.mxu0 %v552
        %636 = vmatprep.subr.bf16.mxu0 0
        %637 = vmatpush1.bf16.msra.mxu0 %v551
        %638 = vmatprep.subr.bf16.mxu0 0
        %639 = vmatpush1.bf16.msra.mxu0 %v550
        %640 = vmatprep.subr.bf16.mxu0 0
        %641 = vmatpush1.bf16.msra.mxu0 %v549
        %642 = vmatprep.subr.bf16.mxu0 0
        %643 = vmatpush1.bf16.msra.mxu0 %v548
        %644 = vmatprep.subr.bf16.mxu0 0
        %645 = vmatpush2.bf16.msra.mxu0 0
        %646 = vmatprep.subr.bf16.mxu0 0
        %647 = vmatpush2.bf16.msra.mxu0 0
        %648 = vmatprep.subr.bf16.mxu0 0
        %649 = vmatpush2.bf16.msra.mxu0 0
        %650 = vmatprep.subr.bf16.mxu0 0
        %651 = vmatpush2.bf16.msra.mxu0 0
        %652 = vmatprep.subr.bf16.mxu0 0
        %653 = vmatpush2.bf16.msra.mxu0 0
        %654 = vmatprep.subr.bf16.mxu0 0
        %655 = vmatpush2.bf16.msra.mxu0 0
        %656 = vmatprep.subr.bf16.mxu0 0
        %657 = vmatpush2.bf16.msra.mxu0 0
        %658 = vmatprep.subr.bf16.mxu0 0
        %659 = vmatpush2.bf16.msra.mxu0 0
        %660 = vmatprep.mubr.bf16.mxu0 0
        %661 = vmatmul.mubr.bf16.gmra.mxu0 %v426
        %v662 = vpop.f32.mrf.mxu0
        %v663 = vadd.f32 %v615, %v662
        %v664 = vpop.f32.mrf.mxu0
        %v665 = vpop.f32.mrf.mxu0
        %v666 = vadd.f32 %v618, %v665
        %v667 = vpop.f32.mrf.mxu0
        %668 = vmatprep.mubr.bf16.mxu0 0
        %669 = vmatmul.mubr.bf16.gmra.mxu0 %v429
        %v670 = vpop.f32.mrf.mxu0
        %v671 = vadd.f32 %v623, %v670
        %v672 = vpop.f32.mrf.mxu0
        %v673 = vpop.f32.mrf.mxu0
        %v674 = vpop.f32.mrf.mxu0
        %675 = vdwg.mxu0
        %v676 = vld [vmem:[%s3] sm:$0x1]
        %v678 = vlaneseq
        %v679 = vshrl.u32 %v678, 7
        %v680 = vsub.s32 0, %v679
        %v681 = vrot.slane %v676, %v680
        %v683 = vmul.f32 %v663, %v681
        %v684 = vmul.f32 %v666, %v681
        %v685 = vmul.f32 %v671, %v681
        %v686 = vld [vmem:[%s4] sm:$0x1]
        %v688 = vlaneseq
        %v689 = vshrl.u32 %v688, 7
        %v690 = vsub.s32 0, %v689
        %v691 = vrot.slane %v686, %v690
        %v693 = vadd.f32 %v683, %v691
        %v694 = vadd.f32 %v684, %v691
        %v695 = vadd.f32 %v685, %v691
        %v696 = vmax.f32 %v693, 0.0
        %v697 = vmax.f32 %v694, 0.0
        %v698 = vmax.f32 %v695, 0.0
        %v699 = vlaneseq
        %v700 = vshrl.u32 %v699, 7
        %v701 = vadd.s32 %v700, 8
        %v702 = vadd.s32 %v700, 16
        %vm703 = vcmp.ge.s32.totalorder %v700, 1
        %vm704 = vcmp.ge.s32.totalorder %v701, 1
        %vm705 = vcmp.ge.s32.totalorder %v702, 1
        %vm706 = vcmp.le.s32.totalorder %v700, 16
        %vm707 = vcmp.le.s32.totalorder %v701, 16
        %vm708 = vcmp.le.s32.totalorder %v702, 16
        %vm709 = vmand %vm703, %vm706
        %vm710 = vmand %vm704, %vm707
        %vm711 = vmand %vm705, %vm708
        %v712 = vsel %vm709, 1, 0
        %v713 = vsel %vm710, 1, 0
        %v714 = vsel %vm711, 1, 0
        %vm715 = vcmp.eq.s32.totalorder %v712, 1
        %vm716 = vcmp.eq.s32.totalorder %v713, 1
        %vm717 = vcmp.eq.s32.totalorder %v714, 1
        %v718 = vsel %vm715, %v696, 0.0
        %v719 = vsel %vm716, %v697, 0.0
        %v720 = vsel %vm717, %v698, 0.0
        %v721 = vpack.c.bf16 %v719, %v718
        %v722 = vld [vmem:[#allocation5] sm:$0xf]
        %v723 = vld [vmem:[#allocation5 + $0x4] sm:$0xf]
        %v724 = vld [vmem:[#allocation5 + $0x8] sm:$0xf]
        %v725 = vld [vmem:[#allocation5 + $0xc] sm:$0xf]
        %v726 = vld [vmem:[#allocation5 + $0x10] sm:$0xf]
        %v727 = vld [vmem:[#allocation5 + $0x14] sm:$0xf]
        %v728 = vld [vmem:[#allocation5 + $0x18] sm:$0xf]
        %v729 = vld [vmem:[#allocation5 + $0x1c] sm:$0xf]
        %v730 = vld [vmem:[#allocation5 + $0x20] sm:$0xf]
        %v731 = vld [vmem:[#allocation5 + $0x24] sm:$0xf]
        %v732 = vld [vmem:[#allocation5 + $0x28] sm:$0xf]
        %v733 = vld [vmem:[#allocation5 + $0x2c] sm:$0xf]
        %v734 = vld [vmem:[#allocation5 + $0x30] sm:$0xf]
        %v735 = vld [vmem:[#allocation5 + $0x34] sm:$0xf]
        %v736 = vld [vmem:[#allocation5 + $0x38] sm:$0xf]
        %v737 = vld [vmem:[#allocation5 + $0x3c] sm:$0xf]
        %v738 = vpack.c.bf16 %v720, %v720
        %s739 = scalar_lea.vmem [#allocation5], 64
        %v740 = vld [vmem:[%s739] sm:$0xf]
        %v741 = vld [vmem:[%s739 + $0x4] sm:$0xf]
        %v742 = vld [vmem:[%s739 + $0x8] sm:$0xf]
        %v743 = vld [vmem:[%s739 + $0xc] sm:$0xf]
        %v744 = vld [vmem:[%s739 + $0x10] sm:$0xf]
        %v745 = vld [vmem:[%s739 + $0x14] sm:$0xf]
        %v746 = vld [vmem:[%s739 + $0x18] sm:$0xf]
        %v747 = vld [vmem:[%s739 + $0x1c] sm:$0xf]
        %v748 = vld [vmem:[%s739 + $0x20] sm:$0xf]
        %v749 = vld [vmem:[%s739 + $0x24] sm:$0xf]
        %v750 = vld [vmem:[%s739 + $0x28] sm:$0xf]
        %v751 = vld [vmem:[%s739 + $0x2c] sm:$0xf]
        %v752 = vld [vmem:[%s739 + $0x30] sm:$0xf]
        %v753 = vld [vmem:[%s739 + $0x34] sm:$0xf]
        %v754 = vld [vmem:[%s739 + $0x38] sm:$0xf]
        %v755 = vld [vmem:[%s739 + $0x3c] sm:$0xf]
        %vm756 = vsmask.f32 7424
        %v758 = vshrl.u32 %v721, 16
        %v760 = vshll.u32 %v721, 16
        %v762 = vrot.slane %v760, 1
        %v763 = vor.u32 %v758, %v762
        %v765 = vshll.u32 %v738, 16
        %v767 = vrot.slane %v765, 1
        %v768 = vsel %vm756, %v763, %v767
        %v786 = vunpack.c.l.b16 %v740
        %v787 = vunpack.c.l.b16 %v741
        %v788 = vunpack.c.l.b16 %v742
        %v789 = vunpack.c.l.b16 %v743
        %v790 = vunpack.c.l.b16 %v744
        %v791 = vunpack.c.l.b16 %v745
        %v792 = vunpack.c.l.b16 %v746
        %v793 = vunpack.c.l.b16 %v747
        %v794 = vunpack.c.l.b16 %v748
        %v795 = vunpack.c.l.b16 %v749
        %v796 = vunpack.c.l.b16 %v750
        %v797 = vunpack.c.l.b16 %v751
        %v798 = vunpack.c.l.b16 %v752
        %v799 = vunpack.c.l.b16 %v753
        %v800 = vunpack.c.l.b16 %v754
        %v801 = vunpack.c.l.b16 %v755
        %v802 = vpack.c.b16 %v787, %v786
        %v803 = vpack.c.b16 %v789, %v788
        %v804 = vpack.c.b16 %v791, %v790
        %v805 = vpack.c.b16 %v793, %v792
        %v806 = vpack.c.b16 %v795, %v794
        %v807 = vpack.c.b16 %v797, %v796
        %v808 = vpack.c.b16 %v799, %v798
        %v809 = vpack.c.b16 %v801, %v800
        %818 = vmatprep.subr.bf16.mxu0 0
        %819 = vmatpush1.bf16.msra.mxu0 %v809
        %820 = vmatprep.subr.bf16.mxu0 0
        %821 = vmatpush1.bf16.msra.mxu0 %v808
        %822 = vmatprep.subr.bf16.mxu0 0
        %823 = vmatpush1.bf16.msra.mxu0 %v807
        %824 = vmatprep.subr.bf16.mxu0 0
        %825 = vmatpush1.bf16.msra.mxu0 %v806
        %826 = vmatprep.subr.bf16.mxu0 0
        %827 = vmatpush1.bf16.msra.mxu0 %v805
        %828 = vmatprep.subr.bf16.mxu0 0
        %829 = vmatpush1.bf16.msra.mxu0 %v804
        %830 = vmatprep.subr.bf16.mxu0 0
        %831 = vmatpush1.bf16.msra.mxu0 %v803
        %832 = vmatprep.subr.bf16.mxu0 0
        %833 = vmatpush1.bf16.msra.mxu0 %v802
        %834 = vmatprep.subr.bf16.mxu0 0
        %835 = vmatpush2.bf16.msra.mxu0 0
        %836 = vmatprep.subr.bf16.mxu0 0
        %837 = vmatpush2.bf16.msra.mxu0 0
        %838 = vmatprep.subr.bf16.mxu0 0
        %839 = vmatpush2.bf16.msra.mxu0 0
        %840 = vmatprep.subr.bf16.mxu0 0
        %841 = vmatpush2.bf16.msra.mxu0 0
        %842 = vmatprep.subr.bf16.mxu0 0
        %843 = vmatpush2.bf16.msra.mxu0 0
        %844 = vmatprep.subr.bf16.mxu0 0
        %845 = vmatpush2.bf16.msra.mxu0 0
        %846 = vmatprep.subr.bf16.mxu0 0
        %847 = vmatpush2.bf16.msra.mxu0 0
        %848 = vmatprep.subr.bf16.mxu0 0
        %849 = vmatpush2.bf16.msra.mxu0 0
        %850 = vmatprep.mubr.bf16.mxu0 0
        %851 = vmatmul.mubr.bf16.gmra.mxu0 %v768
        %v852 = vpop.f32.mrf.mxu0
        %v853 = vadd.f32 0.0, %v852
        %v854 = vpop.f32.mrf.mxu0
        %v855 = vpop.f32.mrf.mxu0
        %v856 = vadd.f32 0.0, %v855
        %v857 = vpop.f32.mrf.mxu0
        %858 = vdwg.mxu0
        %v875 = vunpack.c.l.b16 %v722
        %v876 = vunpack.c.l.b16 %v723
        %v877 = vunpack.c.l.b16 %v724
        %v878 = vunpack.c.l.b16 %v725
        %v879 = vunpack.c.l.b16 %v726
        %v880 = vunpack.c.l.b16 %v727
        %v881 = vunpack.c.l.b16 %v728
        %v882 = vunpack.c.l.b16 %v729
        %v883 = vunpack.c.l.b16 %v730
        %v884 = vunpack.c.l.b16 %v731
        %v885 = vunpack.c.l.b16 %v732
        %v886 = vunpack.c.l.b16 %v733
        %v887 = vunpack.c.l.b16 %v734
        %v888 = vunpack.c.l.b16 %v735
        %v889 = vunpack.c.l.b16 %v736
        %v890 = vunpack.c.l.b16 %v737
        %v891 = vpack.c.b16 %v876, %v875
        %v892 = vpack.c.b16 %v878, %v877
        %v893 = vpack.c.b16 %v880, %v879
        %v894 = vpack.c.b16 %v882, %v881
        %v895 = vpack.c.b16 %v884, %v883
        %v896 = vpack.c.b16 %v886, %v885
        %v897 = vpack.c.b16 %v888, %v887
        %v898 = vpack.c.b16 %v890, %v889
        %907 = vmatprep.subr.bf16.mxu0 0
        %908 = vmatpush1.bf16.msra.mxu0 %v898
        %909 = vmatprep.subr.bf16.mxu0 0
        %910 = vmatpush1.bf16.msra.mxu0 %v897
        %911 = vmatprep.subr.bf16.mxu0 0
        %912 = vmatpush1.bf16.msra.mxu0 %v896
        %913 = vmatprep.subr.bf16.mxu0 0
        %914 = vmatpush1.bf16.msra.mxu0 %v895
        %915 = vmatprep.subr.bf16.mxu0 0
        %916 = vmatpush1.bf16.msra.mxu0 %v894
        %917 = vmatprep.subr.bf16.mxu0 0
        %918 = vmatpush1.bf16.msra.mxu0 %v893
        %919 = vmatprep.subr.bf16.mxu0 0
        %920 = vmatpush1.bf16.msra.mxu0 %v892
        %921 = vmatprep.subr.bf16.mxu0 0
        %922 = vmatpush1.bf16.msra.mxu0 %v891
        %923 = vmatprep.subr.bf16.mxu0 0
        %924 = vmatpush2.bf16.msra.mxu0 0
        %925 = vmatprep.subr.bf16.mxu0 0
        %926 = vmatpush2.bf16.msra.mxu0 0
        %927 = vmatprep.subr.bf16.mxu0 0
        %928 = vmatpush2.bf16.msra.mxu0 0
        %929 = vmatprep.subr.bf16.mxu0 0
        %930 = vmatpush2.bf16.msra.mxu0 0
        %931 = vmatprep.subr.bf16.mxu0 0
        %932 = vmatpush2.bf16.msra.mxu0 0
        %933 = vmatprep.subr.bf16.mxu0 0
        %934 = vmatpush2.bf16.msra.mxu0 0
        %935 = vmatprep.subr.bf16.mxu0 0
        %936 = vmatpush2.bf16.msra.mxu0 0
        %937 = vmatprep.subr.bf16.mxu0 0
        %938 = vmatpush2.bf16.msra.mxu0 0
        %939 = vmatprep.mubr.bf16.mxu0 0
        %940 = vmatmul.mubr.bf16.gmra.mxu0 %v721
        %v941 = vpop.f32.mrf.mxu0
        %v942 = vadd.f32 %v853, %v941
        %v943 = vpop.f32.mrf.mxu0
        %v944 = vpop.f32.mrf.mxu0
        %v945 = vadd.f32 %v856, %v944
        %v946 = vpop.f32.mrf.mxu0
        %947 = vdwg.mxu0
        %s948 = scalar_lea.vmem [#allocation5], 128
        %v949 = vld [vmem:[%s948] sm:$0xf]
        %v950 = vld [vmem:[%s948 + $0x4] sm:$0xf]
        %v951 = vld [vmem:[%s948 + $0x8] sm:$0xf]
        %v952 = vld [vmem:[%s948 + $0xc] sm:$0xf]
        %v953 = vld [vmem:[%s948 + $0x10] sm:$0xf]
        %v954 = vld [vmem:[%s948 + $0x14] sm:$0xf]
        %v955 = vld [vmem:[%s948 + $0x18] sm:$0xf]
        %v956 = vld [vmem:[%s948 + $0x1c] sm:$0xf]
        %v957 = vld [vmem:[%s948 + $0x20] sm:$0xf]
        %v958 = vld [vmem:[%s948 + $0x24] sm:$0xf]
        %v959 = vld [vmem:[%s948 + $0x28] sm:$0xf]
        %v960 = vld [vmem:[%s948 + $0x2c] sm:$0xf]
        %v961 = vld [vmem:[%s948 + $0x30] sm:$0xf]
        %v962 = vld [vmem:[%s948 + $0x34] sm:$0xf]
        %v963 = vld [vmem:[%s948 + $0x38] sm:$0xf]
        %v964 = vld [vmem:[%s948 + $0x3c] sm:$0xf]
        %vm967 = vcmask 1046528
        %v968 = vrot.slane %v721, 1
        %v969 = vrot.slane %v738, 1
        %v970 = vsel %vm967, %v968, %v969
        %v988 = vunpack.c.l.b16 %v949
        %v989 = vunpack.c.l.b16 %v950
        %v990 = vunpack.c.l.b16 %v951
        %v991 = vunpack.c.l.b16 %v952
        %v992 = vunpack.c.l.b16 %v953
        %v993 = vunpack.c.l.b16 %v954
        %v994 = vunpack.c.l.b16 %v955
        %v995 = vunpack.c.l.b16 %v956
        %v996 = vunpack.c.l.b16 %v957
        %v997 = vunpack.c.l.b16 %v958
        %v998 = vunpack.c.l.b16 %v959
        %v999 = vunpack.c.l.b16 %v960
        %v1000 = vunpack.c.l.b16 %v961
        %v1001 = vunpack.c.l.b16 %v962
        %v1002 = vunpack.c.l.b16 %v963
        %v1003 = vunpack.c.l.b16 %v964
        %v1004 = vpack.c.b16 %v989, %v988
        %v1005 = vpack.c.b16 %v991, %v990
        %v1006 = vpack.c.b16 %v993, %v992
        %v1007 = vpack.c.b16 %v995, %v994
        %v1008 = vpack.c.b16 %v997, %v996
        %v1009 = vpack.c.b16 %v999, %v998
        %v1010 = vpack.c.b16 %v1001, %v1000
        %v1011 = vpack.c.b16 %v1003, %v1002
        %1020 = vmatprep.subr.bf16.mxu0 0
        %1021 = vmatpush1.bf16.msra.mxu0 %v1011
        %1022 = vmatprep.subr.bf16.mxu0 0
        %1023 = vmatpush1.bf16.msra.mxu0 %v1010
        %1024 = vmatprep.subr.bf16.mxu0 0
        %1025 = vmatpush1.bf16.msra.mxu0 %v1009
        %1026 = vmatprep.subr.bf16.mxu0 0
        %1027 = vmatpush1.bf16.msra.mxu0 %v1008
        %1028 = vmatprep.subr.bf16.mxu0 0
        %1029 = vmatpush1.bf16.msra.mxu0 %v1007
        %1030 = vmatprep.subr.bf16.mxu0 0
        %1031 = vmatpush1.bf16.msra.mxu0 %v1006
        %1032 = vmatprep.subr.bf16.mxu0 0
        %1033 = vmatpush1.bf16.msra.mxu0 %v1005
        %1034 = vmatprep.subr.bf16.mxu0 0
        %1035 = vmatpush1.bf16.msra.mxu0 %v1004
        %1036 = vmatprep.subr.bf16.mxu0 0
        %1037 = vmatpush2.bf16.msra.mxu0 0
        %1038 = vmatprep.subr.bf16.mxu0 0
        %1039 = vmatpush2.bf16.msra.mxu0 0
        %1040 = vmatprep.subr.bf16.mxu0 0
        %1041 = vmatpush2.bf16.msra.mxu0 0
        %1042 = vmatprep.subr.bf16.mxu0 0
        %1043 = vmatpush2.bf16.msra.mxu0 0
        %1044 = vmatprep.subr.bf16.mxu0 0
        %1045 = vmatpush2.bf16.msra.mxu0 0
        %1046 = vmatprep.subr.bf16.mxu0 0
        %1047 = vmatpush2.bf16.msra.mxu0 0
        %1048 = vmatprep.subr.bf16.mxu0 0
        %1049 = vmatpush2.bf16.msra.mxu0 0
        %1050 = vmatprep.subr.bf16.mxu0 0
        %1051 = vmatpush2.bf16.msra.mxu0 0
        %1052 = vmatprep.mubr.bf16.mxu0 0
        %1053 = vmatmul.mubr.bf16.gmra.mxu0 %v970
        %v1054 = vpop.f32.mrf.mxu0
        %v1055 = vadd.f32 0.0, %v1054
        %v1056 = vpop.f32.mrf.mxu0
        %v1057 = vpop.f32.mrf.mxu0
        %v1058 = vadd.f32 0.0, %v1057
        %v1059 = vpop.f32.mrf.mxu0
        %1060 = vdwg.mxu0
        %v1061 = vadd.f32 %v942, %v1055
        %v1062 = vadd.f32 %v945, %v1058
        %v1063 = vld [vmem:[%s5] sm:$0x1]
        %v1065 = vlaneseq
        %v1066 = vshrl.u32 %v1065, 7
        %v1067 = vsub.s32 0, %v1066
        %v1068 = vrot.slane %v1063, %v1067
        %v1070 = vmul.f32 %v1061, %v1068
        %v1071 = vmul.f32 %v1062, %v1068
        %v1072 = vld [vmem:[%s6] sm:$0x1]
        %v1074 = vlaneseq
        %v1075 = vshrl.u32 %v1074, 7
        %v1076 = vsub.s32 0, %v1075
        %v1077 = vrot.slane %v1072, %v1076
        %v1079 = vadd.f32 %v1070, %v1077
        %v1080 = vadd.f32 %v1071, %v1077
        %v1081 = vld [vmem:[%s353] sm:$0xff]
        %v1082 = vld [vmem:[%s353 + $0x8] sm:$0xff]
        %v1083 = vadd.f32 %v1079, %v1081
        %v1084 = vadd.f32 %v1080, %v1082
        %v1085 = vmax.f32 %v1083, 0.0
        %v1086 = vmax.f32 %v1084, 0.0
        %1087 = vst [vmem:[%s343] sm:$0xff] %v1085
        %1088 = vst [vmem:[%s343 + $0x8] sm:$0xff] %v1086
        %s1089 = sand.u32 %s210, 1
        %s1090 = scalar_lea.sflag [#allocation4], %s1089
        %s1091 = sand.u32 %s210, 1
        %s1092 = smul.addr %s1091, 16
        %s1093 = scalar_lea.vmem [#allocation7], %s1092
        // Predicated region
        $region61: #{tpu_custom_call.1} parent=51 // pred_check
          %p1094 = pneg %p220
        $region62: #{tpu_custom_call.1} parent=51 // pred_check_branch
          %1096 = sbr.rel (%p1094) target = $region64
        $region63: #{tpu_custom_call.1} parent=51 // pred_region
          %s1098 = ssub.s32 256, 256
          %1099 = vsyncadd %s1090, %s1098
          %s1100 = smul.addr %s24, 2
          %s1101 = smul.addr %s1100, 128
          %s1102 = scalar_lea.hbm %s8, %s1101
          %s1103 = sshll.u32 %s1093, 4
          %s1104 = int_to_ptr.vmem [resolvable:$true] %s1103
          %1109 = dma.vmem_to_hbm [thread:$0]  %s1104, 256, %s1102, %s1090, 128, 128, 8
        $region64: #{tpu_custom_call.1} parent=51 // pred_fallthru
          _
      $region52: #{tpu_custom_call.1} parent=5 // pred_fallthru
        _
      %p1110 = scmp.le.s32.totalorder 2, %s19
      // Predicated region
      $region65: #{tpu_custom_call.1} parent=5 // pred_check
        %p1111 = pneg %p1110
      $region66: #{tpu_custom_call.1} parent=5 // pred_check_branch
        %1113 = sbr.rel (%p1111) target = $region68
      $region67: #{tpu_custom_call.1} parent=5 // pred_region
        %s1114 = ssub.s32 %s19, 2
        // Predicated region
        $region69: #{tpu_custom_call.1} parent=67 // pred_check
          %p1115 = pneg %p226
        $region70: #{tpu_custom_call.1} parent=67 // pred_check_branch
          %1117 = sbr.rel (%p1115) target = $region72
        $region71: #{tpu_custom_call.1} parent=67 // pred_region
          %s1118 = sand.u32 %s211, 1
          %s1119 = scalar_lea.sflag [#allocation4], %s1118
          %s1120 = sand.u32 %s211, 1
          %s1121 = smul.addr %s1120, 16
          %s1122 = scalar_lea.vmem [#allocation7], %s1121
          %1123 = dma.done %s1119, 256
        $region72: #{tpu_custom_call.1} parent=67 // pred_fallthru
          _
      $region68: #{tpu_custom_call.1} parent=5 // pred_fallthru
        _
    $region6: #{tpu_custom_call.1} parent=1 // loop_footer
      %s23 = sadd.s32 1, %s19
    $region7: #{tpu_custom_call.1} parent=1 // loop_footer_branch
      %18 = sbr.rel target = $region3
    $region8: #{tpu_custom_call.1} parent=1 // loop_exit
      _
    %1124 = vsyncpa [#allocation3], 1
    %s1125 = scalar_lea.sflag [#allocation3], 1
    %1126 = vsyncpa %s1125, 1
    %1127 = vsyncpa [#allocation6], 1
    %1128 = vsyncpa [#allocation4], 1
    %s1129 = scalar_lea.sflag [#allocation4], 1
    %1130 = vsyncpa %s1129, 1

</llo_original>
